<compile_context>
chip_gen: v6e
topology: v6e:2x2x1
jax: 0.10.0
libtpu: 0.0.40
codegen_flags: <defaults>
</compile_context>

<pallas_src>
import jax
import jax.numpy as jnp
from jax.experimental import pallas as pl
from jax.experimental.pallas import tpu as pltpu

BN_EPS = 1e-5


def _make_tnet_kernel(n_shared, n_linear):
    n_blocks = n_shared + n_linear

    def kernel(*refs):
        x_ref = refs[0]
        blk_refs = refs[1:1 + 6 * n_blocks]
        wf_ref = refs[1 + 6 * n_blocks]
        bf_ref = refs[2 + 6 * n_blocks]
        out_ref = refs[3 + 6 * n_blocks]

        def block(h, idx):
            # Conv1d(k=1)/Linear weight in PyTorch layout (C_out, C_in) + bias,
            # then eval-mode BatchNorm1d folded to a per-channel affine, then ReLU.
            base = 6 * idx
            w = blk_refs[base + 0][...].astype(jnp.float32)      # (C_out, C_in)
            b = blk_refs[base + 1][...].astype(jnp.float32)      # (1, C_out)
            gamma = blk_refs[base + 2][...].astype(jnp.float32)  # (1, C_out)
            beta = blk_refs[base + 3][...].astype(jnp.float32)   # (1, C_out)
            mean = blk_refs[base + 4][...].astype(jnp.float32)   # (1, C_out)
            var = blk_refs[base + 5][...].astype(jnp.float32)    # (1, C_out)
            # y = h @ W.T : contract h's last dim with W's dim 1 (trans_b on MXU).
            y = jax.lax.dot_general(
                h, w, (((1,), (1,)), ((), ())),
                preferred_element_type=jnp.float32)              # (rows, C_out)
            scale = gamma * jax.lax.rsqrt(var + BN_EPS)
            shift = beta - mean * scale
            return jnp.maximum(y * scale + (b * scale + shift), 0.0)

        B, c_in, N = x_ref.shape
        x = x_ref[...].astype(jnp.float32)                       # (B, C_in, N)
        # Point-major layout: channels along lanes -> plain 2-D MXU matmuls.
        h = jnp.transpose(x, (0, 2, 1)).reshape(B * N, c_in)     # (B*N, C_in)

        for i in range(n_shared):                                # shared conv1d MLP
            h = block(h, i)                                      # (B*N, C_i)

        h = jnp.max(h.reshape(B, N, h.shape[-1]), axis=1)        # max over points -> (B, C)

        for i in range(n_linear):                                # dense MLP
            h = block(h, n_shared + i)                           # (B, D_i)

        wf = wf_ref[...].astype(jnp.float32)                     # (D_last, K*K)
        bf = bf_ref[...].astype(jnp.float32)                     # (1, K*K)
        out = jax.lax.dot_general(
            h, wf, (((1,), (0,)), ((), ())),
            preferred_element_type=jnp.float32) + bf             # (B, K*K)
        out_ref[...] = out.astype(out_ref.dtype)

    return kernel


def tnet_forward(points, params):
    """TNet forward pass.

    points: (B, input_dim, N) array (any float dtype; upcast to f32 in-kernel).
    params: dict with
      'shared': list of Conv1d(k=1)+BN+ReLU blocks, each a dict of
                w (C_out, C_in), b (C_out,), gamma/beta/mean/var (C_out,)
      'linear': list of Linear+BN+ReLU blocks with the same fields
      'weight': (D_last, input_dim**2)   (torch.matmul(points, weight))
      'bias'  : (input_dim**2,)          (flattened identity at init)
    Returns (B, input_dim, input_dim) float32 transform matrices.
    """
    shared, linear = params["shared"], params["linear"]
    B, input_dim, _ = points.shape
    kk = params["weight"].shape[1]

    args = [points]
    for blk in shared + linear:
        args += [
            blk["w"],
            blk["b"].reshape(1, -1),
            blk["gamma"].reshape(1, -1),
            blk["beta"].reshape(1, -1),
            blk["mean"].reshape(1, -1),
            blk["var"].reshape(1, -1),
        ]
    args += [params["weight"], params["bias"].reshape(1, -1)]

    vmem = pl.BlockSpec(memory_space=pltpu.MemorySpace.VMEM)
    out = pl.pallas_call(
        _make_tnet_kernel(len(shared), len(linear)),
        out_shape=jax.ShapeDtypeStruct((B, kk), jnp.float32),
        in_specs=[vmem] * len(args),
        out_specs=vmem,
    )(*args)
    return out.reshape(B, input_dim, input_dim)


def _reference(points, params):
    """Pure-JAX mirror of TNet.forward (eval-mode BatchNorm)."""
    h = points.astype(jnp.float32)                               # (B, C, N)
    for blk in params["shared"]:
        y = jnp.einsum("oc,bcn->bon", blk["w"], h) + blk["b"][None, :, None]
        scale = blk["gamma"] / jnp.sqrt(blk["var"] + BN_EPS)
        y = (y - blk["mean"][None, :, None]) * scale[None, :, None] + blk["beta"][None, :, None]
        h = jnp.maximum(y, 0.0)
    h = jnp.max(h, axis=2)                                       # (B, C_last1)
    for blk in params["linear"]:
        y = h @ blk["w"].T + blk["b"]
        scale = blk["gamma"] / jnp.sqrt(blk["var"] + BN_EPS)
        y = (y - blk["mean"]) * scale + blk["beta"]
        h = jnp.maximum(y, 0.0)
    out = h @ params["weight"] + params["bias"]
    k = points.shape[1]
    return out.reshape(points.shape[0], k, k)


if __name__ == "__main__":
    key = jax.random.PRNGKey(0)
    B, N = 2, 16
    INPUT_DIM = 3
    DIMS1 = (16, 32, 64)      # shared conv1d MLP widths (output_dims1)
    DIMS2 = (32, 16)          # dense MLP widths (output_dims2)

    def make_block(k, cin, cout):
        k1, k2, k3, k4, k5, k6 = jax.random.split(k, 6)
        return dict(
            w=jax.random.normal(k1, (cout, cin), jnp.float32) * (cin ** -0.5),
            b=0.1 * jax.random.normal(k2, (cout,), jnp.float32),
            gamma=1.0 + 0.1 * jax.random.normal(k3, (cout,), jnp.float32),
            beta=0.1 * jax.random.normal(k4, (cout,), jnp.float32),
            mean=0.1 * jax.random.normal(k5, (cout,), jnp.float32),
            var=0.5 + jnp.abs(jax.random.normal(k6, (cout,), jnp.float32)),
        )

    n_blocks = len(DIMS1) + len(DIMS2)
    keys = jax.random.split(key, n_blocks + 2)

    shared, cin = [], INPUT_DIM
    for i, cout in enumerate(DIMS1):
        shared.append(make_block(keys[i], cin, cout))
        cin = cout
    linear = []
    for j, cout in enumerate(DIMS2):
        linear.append(make_block(keys[len(DIMS1) + j], cin, cout))
        cin = cout

    params = dict(
        shared=shared,
        linear=linear,
        # PyTorch init is weight=zeros, bias=eye; keep bias=eye (as in the module)
        # but use a small random weight so the correctness check is non-trivial.
        weight=0.1 * jax.random.normal(
            keys[n_blocks], (DIMS2[-1], INPUT_DIM * INPUT_DIM), jnp.float32),
        bias=jnp.eye(INPUT_DIM, dtype=jnp.float32).reshape(-1),
    )

    points = jax.random.normal(keys[n_blocks + 1], (B, INPUT_DIM, N), jnp.float32)

    out = tnet_forward(points, params)
    jax.block_until_ready(out)

    ref = _reference(points, params)
    assert out.shape == (B, INPUT_DIM, INPUT_DIM)
    assert jnp.allclose(out, ref, rtol=2e-2, atol=2e-2), float(jnp.max(jnp.abs(out - ref)))

    print("KERNEL_OK")
</pallas_src>

<mosaic_0001>
module attributes {stable_mosaic.version = 11 : i64} {
  func.func @kernel(%arg0: memref<2x3x16xf32, #tpu.memory_space<vmem>>, %arg1: memref<16x3xf32, #tpu.memory_space<vmem>>, %arg2: memref<1x16xf32, #tpu.memory_space<vmem>>, %arg3: memref<1x16xf32, #tpu.memory_space<vmem>>, %arg4: memref<1x16xf32, #tpu.memory_space<vmem>>, %arg5: memref<1x16xf32, #tpu.memory_space<vmem>>, %arg6: memref<1x16xf32, #tpu.memory_space<vmem>>, %arg7: memref<32x16xf32, #tpu.memory_space<vmem>>, %arg8: memref<1x32xf32, #tpu.memory_space<vmem>>, %arg9: memref<1x32xf32, #tpu.memory_space<vmem>>, %arg10: memref<1x32xf32, #tpu.memory_space<vmem>>, %arg11: memref<1x32xf32, #tpu.memory_space<vmem>>, %arg12: memref<1x32xf32, #tpu.memory_space<vmem>>, %arg13: memref<64x32xf32, #tpu.memory_space<vmem>>, %arg14: memref<1x64xf32, #tpu.memory_space<vmem>>, %arg15: memref<1x64xf32, #tpu.memory_space<vmem>>, %arg16: memref<1x64xf32, #tpu.memory_space<vmem>>, %arg17: memref<1x64xf32, #tpu.memory_space<vmem>>, %arg18: memref<1x64xf32, #tpu.memory_space<vmem>>, %arg19: memref<32x64xf32, #tpu.memory_space<vmem>>, %arg20: memref<1x32xf32, #tpu.memory_space<vmem>>, %arg21: memref<1x32xf32, #tpu.memory_space<vmem>>, %arg22: memref<1x32xf32, #tpu.memory_space<vmem>>, %arg23: memref<1x32xf32, #tpu.memory_space<vmem>>, %arg24: memref<1x32xf32, #tpu.memory_space<vmem>>, %arg25: memref<16x32xf32, #tpu.memory_space<vmem>>, %arg26: memref<1x16xf32, #tpu.memory_space<vmem>>, %arg27: memref<1x16xf32, #tpu.memory_space<vmem>>, %arg28: memref<1x16xf32, #tpu.memory_space<vmem>>, %arg29: memref<1x16xf32, #tpu.memory_space<vmem>>, %arg30: memref<1x16xf32, #tpu.memory_space<vmem>>, %arg31: memref<16x9xf32, #tpu.memory_space<vmem>>, %arg32: memref<1x9xf32, #tpu.memory_space<vmem>>, %arg33: memref<2x9xf32, #tpu.memory_space<vmem>>) attributes {dimension_semantics = [], scalar_prefetch = 0 : i64, scratch_operands = 0 : i64, tpu.core_type = #tpu.core_type<tc>} {
    %c0 = arith.constant 0 : index
    %c0_0 = arith.constant 0 : index
    %c0_1 = arith.constant 0 : index
    %0 = vector.load %arg0[%c0, %c0_0, %c0_1] : memref<2x3x16xf32, #tpu.memory_space<vmem>>, vector<2x3x16xf32>
    %1 = tpu.transpose %0, [0, 2, 1] : vector<2x3x16xf32> -> vector<2x16x3xf32>
    %2 = vector.shape_cast %1 : vector<2x16x3xf32> to vector<32x3xf32>
    %c0_2 = arith.constant 0 : index
    %c0_3 = arith.constant 0 : index
    %3 = vector.load %arg1[%c0_2, %c0_3] : memref<16x3xf32, #tpu.memory_space<vmem>>, vector<16x3xf32>
    %c0_4 = arith.constant 0 : index
    %c0_5 = arith.constant 0 : index
    %4 = vector.load %arg2[%c0_4, %c0_5] : memref<1x16xf32, #tpu.memory_space<vmem>>, vector<1x16xf32>
    %c0_6 = arith.constant 0 : index
    %c0_7 = arith.constant 0 : index
    %5 = vector.load %arg3[%c0_6, %c0_7] : memref<1x16xf32, #tpu.memory_space<vmem>>, vector<1x16xf32>
    %c0_8 = arith.constant 0 : index
    %c0_9 = arith.constant 0 : index
    %6 = vector.load %arg4[%c0_8, %c0_9] : memref<1x16xf32, #tpu.memory_space<vmem>>, vector<1x16xf32>
    %c0_10 = arith.constant 0 : index
    %c0_11 = arith.constant 0 : index
    %7 = vector.load %arg5[%c0_10, %c0_11] : memref<1x16xf32, #tpu.memory_space<vmem>>, vector<1x16xf32>
    %c0_12 = arith.constant 0 : index
    %c0_13 = arith.constant 0 : index
    %8 = vector.load %arg6[%c0_12, %c0_13] : memref<1x16xf32, #tpu.memory_space<vmem>>, vector<1x16xf32>
    %cst = arith.constant dense<0.000000e+00> : vector<32x16xf32>
    %9 = tpu.matmul %2, %3, %cst {dimension_numbers = #tpu.dot_dimension_numbers<[1], [1], [0], [0], [0, 0, 1, 0], [], []>} : vector<32x3xf32>, vector<16x3xf32>, vector<32x16xf32> -> vector<32x16xf32>
    %cst_14 = arith.constant 9.99999974E-6 : f32
    %10 = vector.broadcast %cst_14 : f32 to vector<1x16xf32>
    %11 = arith.addf %8, %10 : vector<1x16xf32>
    %12 = math.rsqrt %11 : vector<1x16xf32>
    %13 = arith.mulf %5, %12 : vector<1x16xf32>
    %14 = arith.mulf %7, %13 : vector<1x16xf32>
    %15 = arith.subf %6, %14 : vector<1x16xf32>
    %16 = vector.broadcast %13 : vector<1x16xf32> to vector<32x16xf32>
    %17 = arith.mulf %9, %16 : vector<32x16xf32>
    %18 = arith.mulf %4, %13 : vector<1x16xf32>
    %19 = arith.addf %18, %15 : vector<1x16xf32>
    %20 = vector.broadcast %19 : vector<1x16xf32> to vector<32x16xf32>
    %21 = arith.addf %17, %20 : vector<32x16xf32>
    %cst_15 = arith.constant 0.000000e+00 : f32
    %22 = vector.broadcast %cst_15 : f32 to vector<32x16xf32>
    %23 = arith.maximumf %21, %22 : vector<32x16xf32>
    %c0_16 = arith.constant 0 : index
    %c0_17 = arith.constant 0 : index
    %24 = vector.load %arg7[%c0_16, %c0_17] : memref<32x16xf32, #tpu.memory_space<vmem>>, vector<32x16xf32>
    %c0_18 = arith.constant 0 : index
    %c0_19 = arith.constant 0 : index
    %25 = vector.load %arg8[%c0_18, %c0_19] : memref<1x32xf32, #tpu.memory_space<vmem>>, vector<1x32xf32>
    %c0_20 = arith.constant 0 : index
    %c0_21 = arith.constant 0 : index
    %26 = vector.load %arg9[%c0_20, %c0_21] : memref<1x32xf32, #tpu.memory_space<vmem>>, vector<1x32xf32>
    %c0_22 = arith.constant 0 : index
    %c0_23 = arith.constant 0 : index
    %27 = vector.load %arg10[%c0_22, %c0_23] : memref<1x32xf32, #tpu.memory_space<vmem>>, vector<1x32xf32>
    %c0_24 = arith.constant 0 : index
    %c0_25 = arith.constant 0 : index
    %28 = vector.load %arg11[%c0_24, %c0_25] : memref<1x32xf32, #tpu.memory_space<vmem>>, vector<1x32xf32>
    %c0_26 = arith.constant 0 : index
    %c0_27 = arith.constant 0 : index
    %29 = vector.load %arg12[%c0_26, %c0_27] : memref<1x32xf32, #tpu.memory_space<vmem>>, vector<1x32xf32>
    %cst_28 = arith.constant dense<0.000000e+00> : vector<32x32xf32>
    %30 = tpu.matmul %23, %24, %cst_28 {dimension_numbers = #tpu.dot_dimension_numbers<[1], [1], [0], [0], [0, 0, 1, 0], [], []>} : vector<32x16xf32>, vector<32x16xf32>, vector<32x32xf32> -> vector<32x32xf32>
    %cst_29 = arith.constant 9.99999974E-6 : f32
    %31 = vector.broadcast %cst_29 : f32 to vector<1x32xf32>
    %32 = arith.addf %29, %31 : vector<1x32xf32>
    %33 = math.rsqrt %32 : vector<1x32xf32>
    %34 = arith.mulf %26, %33 : vector<1x32xf32>
    %35 = arith.mulf %28, %34 : vector<1x32xf32>
    %36 = arith.subf %27, %35 : vector<1x32xf32>
    %37 = vector.broadcast %34 : vector<1x32xf32> to vector<32x32xf32>
    %38 = arith.mulf %30, %37 : vector<32x32xf32>
    %39 = arith.mulf %25, %34 : vector<1x32xf32>
    %40 = arith.addf %39, %36 : vector<1x32xf32>
    %41 = vector.broadcast %40 : vector<1x32xf32> to vector<32x32xf32>
    %42 = arith.addf %38, %41 : vector<32x32xf32>
    %cst_30 = arith.constant 0.000000e+00 : f32
    %43 = vector.broadcast %cst_30 : f32 to vector<32x32xf32>
    %44 = arith.maximumf %42, %43 : vector<32x32xf32>
    %c0_31 = arith.constant 0 : index
    %c0_32 = arith.constant 0 : index
    %45 = vector.load %arg13[%c0_31, %c0_32] : memref<64x32xf32, #tpu.memory_space<vmem>>, vector<64x32xf32>
    %c0_33 = arith.constant 0 : index
    %c0_34 = arith.constant 0 : index
    %46 = vector.load %arg14[%c0_33, %c0_34] : memref<1x64xf32, #tpu.memory_space<vmem>>, vector<1x64xf32>
    %c0_35 = arith.constant 0 : index
    %c0_36 = arith.constant 0 : index
    %47 = vector.load %arg15[%c0_35, %c0_36] : memref<1x64xf32, #tpu.memory_space<vmem>>, vector<1x64xf32>
    %c0_37 = arith.constant 0 : index
    %c0_38 = arith.constant 0 : index
    %48 = vector.load %arg16[%c0_37, %c0_38] : memref<1x64xf32, #tpu.memory_space<vmem>>, vector<1x64xf32>
    %c0_39 = arith.constant 0 : index
    %c0_40 = arith.constant 0 : index
    %49 = vector.load %arg17[%c0_39, %c0_40] : memref<1x64xf32, #tpu.memory_space<vmem>>, vector<1x64xf32>
    %c0_41 = arith.constant 0 : index
    %c0_42 = arith.constant 0 : index
    %50 = vector.load %arg18[%c0_41, %c0_42] : memref<1x64xf32, #tpu.memory_space<vmem>>, vector<1x64xf32>
    %cst_43 = arith.constant dense<0.000000e+00> : vector<32x64xf32>
    %51 = tpu.matmul %44, %45, %cst_43 {dimension_numbers = #tpu.dot_dimension_numbers<[1], [1], [0], [0], [0, 0, 1, 0], [], []>} : vector<32x32xf32>, vector<64x32xf32>, vector<32x64xf32> -> vector<32x64xf32>
    %cst_44 = arith.constant 9.99999974E-6 : f32
    %52 = vector.broadcast %cst_44 : f32 to vector<1x64xf32>
    %53 = arith.addf %50, %52 : vector<1x64xf32>
    %54 = math.rsqrt %53 : vector<1x64xf32>
    %55 = arith.mulf %47, %54 : vector<1x64xf32>
    %56 = arith.mulf %49, %55 : vector<1x64xf32>
    %57 = arith.subf %48, %56 : vector<1x64xf32>
    %58 = vector.broadcast %55 : vector<1x64xf32> to vector<32x64xf32>
    %59 = arith.mulf %51, %58 : vector<32x64xf32>
    %60 = arith.mulf %46, %55 : vector<1x64xf32>
    %61 = arith.addf %60, %57 : vector<1x64xf32>
    %62 = vector.broadcast %61 : vector<1x64xf32> to vector<32x64xf32>
    %63 = arith.addf %59, %62 : vector<32x64xf32>
    %cst_45 = arith.constant 0.000000e+00 : f32
    %64 = vector.broadcast %cst_45 : f32 to vector<32x64xf32>
    %65 = arith.maximumf %63, %64 : vector<32x64xf32>
    %66 = vector.shape_cast %65 : vector<32x64xf32> to vector<2x16x64xf32>
    %cst_46 = arith.constant dense<0xFF800000> : vector<2x64xf32>
    %67 = vector.multi_reduction <maximumf>, %66, %cst_46 [1] : vector<2x16x64xf32> to vector<2x64xf32>
    %c0_47 = arith.constant 0 : index
    %c0_48 = arith.constant 0 : index
    %68 = vector.load %arg19[%c0_47, %c0_48] : memref<32x64xf32, #tpu.memory_space<vmem>>, vector<32x64xf32>
    %c0_49 = arith.constant 0 : index
    %c0_50 = arith.constant 0 : index
    %69 = vector.load %arg20[%c0_49, %c0_50] : memref<1x32xf32, #tpu.memory_space<vmem>>, vector<1x32xf32>
    %c0_51 = arith.constant 0 : index
    %c0_52 = arith.constant 0 : index
    %70 = vector.load %arg21[%c0_51, %c0_52] : memref<1x32xf32, #tpu.memory_space<vmem>>, vector<1x32xf32>
    %c0_53 = arith.constant 0 : index
    %c0_54 = arith.constant 0 : index
    %71 = vector.load %arg22[%c0_53, %c0_54] : memref<1x32xf32, #tpu.memory_space<vmem>>, vector<1x32xf32>
    %c0_55 = arith.constant 0 : index
    %c0_56 = arith.constant 0 : index
    %72 = vector.load %arg23[%c0_55, %c0_56] : memref<1x32xf32, #tpu.memory_space<vmem>>, vector<1x32xf32>
    %c0_57 = arith.constant 0 : index
    %c0_58 = arith.constant 0 : index
    %73 = vector.load %arg24[%c0_57, %c0_58] : memref<1x32xf32, #tpu.memory_space<vmem>>, vector<1x32xf32>
    %cst_59 = arith.constant dense<0.000000e+00> : vector<2x32xf32>
    %74 = tpu.matmul %67, %68, %cst_59 {dimension_numbers = #tpu.dot_dimension_numbers<[1], [1], [0], [0], [0, 0, 1, 0], [], []>} : vector<2x64xf32>, vector<32x64xf32>, vector<2x32xf32> -> vector<2x32xf32>
    %cst_60 = arith.constant 9.99999974E-6 : f32
    %75 = vector.broadcast %cst_60 : f32 to vector<1x32xf32>
    %76 = arith.addf %73, %75 : vector<1x32xf32>
    %77 = math.rsqrt %76 : vector<1x32xf32>
    %78 = arith.mulf %70, %77 : vector<1x32xf32>
    %79 = arith.mulf %72, %78 : vector<1x32xf32>
    %80 = arith.subf %71, %79 : vector<1x32xf32>
    %81 = vector.broadcast %78 : vector<1x32xf32> to vector<2x32xf32>
    %82 = arith.mulf %74, %81 : vector<2x32xf32>
    %83 = arith.mulf %69, %78 : vector<1x32xf32>
    %84 = arith.addf %83, %80 : vector<1x32xf32>
    %85 = vector.broadcast %84 : vector<1x32xf32> to vector<2x32xf32>
    %86 = arith.addf %82, %85 : vector<2x32xf32>
    %cst_61 = arith.constant 0.000000e+00 : f32
    %87 = vector.broadcast %cst_61 : f32 to vector<2x32xf32>
    %88 = arith.maximumf %86, %87 : vector<2x32xf32>
    %c0_62 = arith.constant 0 : index
    %c0_63 = arith.constant 0 : index
    %89 = vector.load %arg25[%c0_62, %c0_63] : memref<16x32xf32, #tpu.memory_space<vmem>>, vector<16x32xf32>
    %c0_64 = arith.constant 0 : index
    %c0_65 = arith.constant 0 : index
    %90 = vector.load %arg26[%c0_64, %c0_65] : memref<1x16xf32, #tpu.memory_space<vmem>>, vector<1x16xf32>
    %c0_66 = arith.constant 0 : index
    %c0_67 = arith.constant 0 : index
    %91 = vector.load %arg27[%c0_66, %c0_67] : memref<1x16xf32, #tpu.memory_space<vmem>>, vector<1x16xf32>
    %c0_68 = arith.constant 0 : index
    %c0_69 = arith.constant 0 : index
    %92 = vector.load %arg28[%c0_68, %c0_69] : memref<1x16xf32, #tpu.memory_space<vmem>>, vector<1x16xf32>
    %c0_70 = arith.constant 0 : index
    %c0_71 = arith.constant 0 : index
    %93 = vector.load %arg29[%c0_70, %c0_71] : memref<1x16xf32, #tpu.memory_space<vmem>>, vector<1x16xf32>
    %c0_72 = arith.constant 0 : index
    %c0_73 = arith.constant 0 : index
    %94 = vector.load %arg30[%c0_72, %c0_73] : memref<1x16xf32, #tpu.memory_space<vmem>>, vector<1x16xf32>
    %cst_74 = arith.constant dense<0.000000e+00> : vector<2x16xf32>
    %95 = tpu.matmul %88, %89, %cst_74 {dimension_numbers = #tpu.dot_dimension_numbers<[1], [1], [0], [0], [0, 0, 1, 0], [], []>} : vector<2x32xf32>, vector<16x32xf32>, vector<2x16xf32> -> vector<2x16xf32>
    %cst_75 = arith.constant 9.99999974E-6 : f32
    %96 = vector.broadcast %cst_75 : f32 to vector<1x16xf32>
    %97 = arith.addf %94, %96 : vector<1x16xf32>
    %98 = math.rsqrt %97 : vector<1x16xf32>
    %99 = arith.mulf %91, %98 : vector<1x16xf32>
    %100 = arith.mulf %93, %99 : vector<1x16xf32>
    %101 = arith.subf %92, %100 : vector<1x16xf32>
    %102 = vector.broadcast %99 : vector<1x16xf32> to vector<2x16xf32>
    %103 = arith.mulf %95, %102 : vector<2x16xf32>
    %104 = arith.mulf %90, %99 : vector<1x16xf32>
    %105 = arith.addf %104, %101 : vector<1x16xf32>
    %106 = vector.broadcast %105 : vector<1x16xf32> to vector<2x16xf32>
    %107 = arith.addf %103, %106 : vector<2x16xf32>
    %cst_76 = arith.constant 0.000000e+00 : f32
    %108 = vector.broadcast %cst_76 : f32 to vector<2x16xf32>
    %109 = arith.maximumf %107, %108 : vector<2x16xf32>
    %c0_77 = arith.constant 0 : index
    %c0_78 = arith.constant 0 : index
    %110 = vector.load %arg31[%c0_77, %c0_78] : memref<16x9xf32, #tpu.memory_space<vmem>>, vector<16x9xf32>
    %c0_79 = arith.constant 0 : index
    %c0_80 = arith.constant 0 : index
    %111 = vector.load %arg32[%c0_79, %c0_80] : memref<1x9xf32, #tpu.memory_space<vmem>>, vector<1x9xf32>
    %cst_81 = arith.constant dense<0.000000e+00> : vector<2x9xf32>
    %112 = tpu.matmul %109, %110, %cst_81 {dimension_numbers = #tpu.dot_dimension_numbers<[1], [0], [0], [1], [0, 0, 1, 1], [], []>} : vector<2x16xf32>, vector<16x9xf32>, vector<2x9xf32> -> vector<2x9xf32>
    %113 = vector.broadcast %111 : vector<1x9xf32> to vector<2x9xf32>
    %114 = arith.addf %112, %113 : vector<2x9xf32>
    %c0_82 = arith.constant 0 : index
    %c0_83 = arith.constant 0 : index
    %115 = vector.load %arg33[%c0_82, %c0_83] : memref<2x9xf32, #tpu.memory_space<vmem>>, vector<2x9xf32>
    tpu.vector_store %arg33[%c0_82, %c0_83], %114 {strides = array<i32>} : memref<2x9xf32, #tpu.memory_space<vmem>>, vector<2x9xf32>,
    return
  }
}

</mosaic_0001>

<llo_original>
// kernel: tpu_custom_call.1
$region0: #{tpu_custom_call.1}
  #allocation0 [shape = 'u32[]', space=smem, size = 0x4, offset = 0x4, fixed_abs, tag = 'smem constant byte address 0x4 - core index']
  #allocation1 [shape = 'u32[144,128]{1,0:T(1,128)}', space=vmem, size = 0x12000, scoped, tag = 'internal scratch']
  %s0 = inlined_call_operand.smem [shape: u32[34], index: -1, kind: input, shape index: {}]
  %s1 = sld [smem:[%s0]]
  %s2 = scalar_lea.smem %s0, 1
  %s3 = sld [smem:[%s2]]
  %s4 = scalar_lea.smem %s0, 2
  %s5 = sld [smem:[%s4]]
  %s6 = scalar_lea.smem %s0, 3
  %s7 = sld [smem:[%s6]]
  %s8 = scalar_lea.smem %s0, 4
  %s9 = sld [smem:[%s8]]
  %s10 = scalar_lea.smem %s0, 5
  %s11 = sld [smem:[%s10]]
  %s12 = scalar_lea.smem %s0, 6
  %s13 = sld [smem:[%s12]]
  %s14 = scalar_lea.smem %s0, 7
  %s15 = sld [smem:[%s14]]
  %s16 = scalar_lea.smem %s0, 8
  %s17 = sld [smem:[%s16]]
  %s18 = scalar_lea.smem %s0, 9
  %s19 = sld [smem:[%s18]]
  %s20 = scalar_lea.smem %s0, 10
  %s21 = sld [smem:[%s20]]
  %s22 = scalar_lea.smem %s0, 11
  %s23 = sld [smem:[%s22]]
  %s24 = scalar_lea.smem %s0, 12
  %s25 = sld [smem:[%s24]]
  %s26 = scalar_lea.smem %s0, 13
  %s27 = sld [smem:[%s26]]
  %s28 = scalar_lea.smem %s0, 14
  %s29 = sld [smem:[%s28]]
  %s30 = scalar_lea.smem %s0, 15
  %s31 = sld [smem:[%s30]]
  %s32 = scalar_lea.smem %s0, 16
  %s33 = sld [smem:[%s32]]
  %s34 = scalar_lea.smem %s0, 17
  %s35 = sld [smem:[%s34]]
  %s36 = scalar_lea.smem %s0, 18
  %s37 = sld [smem:[%s36]]
  %s38 = scalar_lea.smem %s0, 19
  %s39 = sld [smem:[%s38]]
  %s40 = scalar_lea.smem %s0, 20
  %s41 = sld [smem:[%s40]]
  %s42 = scalar_lea.smem %s0, 21
  %s43 = sld [smem:[%s42]]
  %s44 = scalar_lea.smem %s0, 22
  %s45 = sld [smem:[%s44]]
  %s46 = scalar_lea.smem %s0, 23
  %s47 = sld [smem:[%s46]]
  %s48 = scalar_lea.smem %s0, 24
  %s49 = sld [smem:[%s48]]
  %s50 = scalar_lea.smem %s0, 25
  %s51 = sld [smem:[%s50]]
  %s52 = scalar_lea.smem %s0, 26
  %s53 = sld [smem:[%s52]]
  %s54 = scalar_lea.smem %s0, 27
  %s55 = sld [smem:[%s54]]
  %s56 = scalar_lea.smem %s0, 28
  %s57 = sld [smem:[%s56]]
  %s58 = scalar_lea.smem %s0, 29
  %s59 = sld [smem:[%s58]]
  %s60 = scalar_lea.smem %s0, 30
  %s61 = sld [smem:[%s60]]
  %s62 = scalar_lea.smem %s0, 31
  %s63 = sld [smem:[%s62]]
  %s64 = scalar_lea.smem %s0, 32
  %s65 = sld [smem:[%s64]]
  %s66 = scalar_lea.smem %s0, 33
  %s67 = sld [smem:[%s66]]
  %s68 = sld [smem:[#allocation0]]
  $region142: #{tpu_custom_call.1} parent=0
    _
  %s70 = ssub.s32 1, %s68
  %s71 = scalar_select 0, %s70, %s68
  $region1: #{tpu_custom_call.1} parent=0
    #allocation2 [shape = 'u8[1024]{0}', space=vmem, size = 0x400, scoped, tag = 'output window, operand 0, single buffered']
    #allocation3 [shape = 's32[1]{0}', space=sflag, size = 0x4, scoped, tag = 'scoped memory for tpu_custom_call.1']
    %72 = vsyncpa [#allocation3], 0
    // Predicated region
    $region2: #{tpu_custom_call.1} parent=1 // pred_check
      _
    $region3: #{tpu_custom_call.1} parent=1 // pred_check_branch
      %74 = sbr.rel (0) target = $region5
    $region4: #{tpu_custom_call.1} parent=1 // pred_region
      _
    $region5: #{tpu_custom_call.1} parent=1 // pred_fallthru
      _
    // Predicated region
    $region6: #{tpu_custom_call.1} parent=1 // pred_check
      _
    $region7: #{tpu_custom_call.1} parent=1 // pred_check_branch
      %76 = sbr.rel (0) target = $region9
    $region8: #{tpu_custom_call.1} parent=1 // pred_region
      _
    $region9: #{tpu_custom_call.1} parent=1 // pred_fallthru
      _
    // Predicated region
    $region10: #{tpu_custom_call.1} parent=1 // pred_check
      _
    $region11: #{tpu_custom_call.1} parent=1 // pred_check_branch
      %78 = sbr.rel (0) target = $region13
    $region12: #{tpu_custom_call.1} parent=1 // pred_region
      _
    $region13: #{tpu_custom_call.1} parent=1 // pred_fallthru
      _
    // Predicated region
    $region14: #{tpu_custom_call.1} parent=1 // pred_check
      _
    $region15: #{tpu_custom_call.1} parent=1 // pred_check_branch
      %80 = sbr.rel (0) target = $region17
    $region16: #{tpu_custom_call.1} parent=1 // pred_region
      _
    $region17: #{tpu_custom_call.1} parent=1 // pred_fallthru
      _
    // Predicated region
    $region18: #{tpu_custom_call.1} parent=1 // pred_check
      _
    $region19: #{tpu_custom_call.1} parent=1 // pred_check_branch
      %82 = sbr.rel (0) target = $region21
    $region20: #{tpu_custom_call.1} parent=1 // pred_region
      _
    $region21: #{tpu_custom_call.1} parent=1 // pred_fallthru
      _
    // Predicated region
    $region22: #{tpu_custom_call.1} parent=1 // pred_check
      _
    $region23: #{tpu_custom_call.1} parent=1 // pred_check_branch
      %84 = sbr.rel (0) target = $region25
    $region24: #{tpu_custom_call.1} parent=1 // pred_region
      _
    $region25: #{tpu_custom_call.1} parent=1 // pred_fallthru
      _
    // Predicated region
    $region26: #{tpu_custom_call.1} parent=1 // pred_check
      _
    $region27: #{tpu_custom_call.1} parent=1 // pred_check_branch
      %86 = sbr.rel (0) target = $region29
    $region28: #{tpu_custom_call.1} parent=1 // pred_region
      _
    $region29: #{tpu_custom_call.1} parent=1 // pred_fallthru
      _
    // Predicated region
    $region30: #{tpu_custom_call.1} parent=1 // pred_check
      _
    $region31: #{tpu_custom_call.1} parent=1 // pred_check_branch
      %88 = sbr.rel (0) target = $region33
    $region32: #{tpu_custom_call.1} parent=1 // pred_region
      _
    $region33: #{tpu_custom_call.1} parent=1 // pred_fallthru
      _
    // Predicated region
    $region34: #{tpu_custom_call.1} parent=1 // pred_check
      _
    $region35: #{tpu_custom_call.1} parent=1 // pred_check_branch
      %90 = sbr.rel (0) target = $region37
    $region36: #{tpu_custom_call.1} parent=1 // pred_region
      _
    $region37: #{tpu_custom_call.1} parent=1 // pred_fallthru
      _
    // Predicated region
    $region38: #{tpu_custom_call.1} parent=1 // pred_check
      _
    $region39: #{tpu_custom_call.1} parent=1 // pred_check_branch
      %92 = sbr.rel (0) target = $region41
    $region40: #{tpu_custom_call.1} parent=1 // pred_region
      _
    $region41: #{tpu_custom_call.1} parent=1 // pred_fallthru
      _
    // Predicated region
    $region42: #{tpu_custom_call.1} parent=1 // pred_check
      _
    $region43: #{tpu_custom_call.1} parent=1 // pred_check_branch
      %94 = sbr.rel (0) target = $region45
    $region44: #{tpu_custom_call.1} parent=1 // pred_region
      _
    $region45: #{tpu_custom_call.1} parent=1 // pred_fallthru
      _
    // Predicated region
    $region46: #{tpu_custom_call.1} parent=1 // pred_check
      _
    $region47: #{tpu_custom_call.1} parent=1 // pred_check_branch
      %96 = sbr.rel (0) target = $region49
    $region48: #{tpu_custom_call.1} parent=1 // pred_region
      _
    $region49: #{tpu_custom_call.1} parent=1 // pred_fallthru
      _
    // Predicated region
    $region50: #{tpu_custom_call.1} parent=1 // pred_check
      _
    $region51: #{tpu_custom_call.1} parent=1 // pred_check_branch
      %98 = sbr.rel (0) target = $region53
    $region52: #{tpu_custom_call.1} parent=1 // pred_region
      _
    $region53: #{tpu_custom_call.1} parent=1 // pred_fallthru
      _
    // Predicated region
    $region54: #{tpu_custom_call.1} parent=1 // pred_check
      _
    $region55: #{tpu_custom_call.1} parent=1 // pred_check_branch
      %100 = sbr.rel (0) target = $region57
    $region56: #{tpu_custom_call.1} parent=1 // pred_region
      _
    $region57: #{tpu_custom_call.1} parent=1 // pred_fallthru
      _
    // Predicated region
    $region58: #{tpu_custom_call.1} parent=1 // pred_check
      _
    $region59: #{tpu_custom_call.1} parent=1 // pred_check_branch
      %102 = sbr.rel (0) target = $region61
    $region60: #{tpu_custom_call.1} parent=1 // pred_region
      _
    $region61: #{tpu_custom_call.1} parent=1 // pred_fallthru
      _
    // Predicated region
    $region62: #{tpu_custom_call.1} parent=1 // pred_check
      _
    $region63: #{tpu_custom_call.1} parent=1 // pred_check_branch
      %104 = sbr.rel (0) target = $region65
    $region64: #{tpu_custom_call.1} parent=1 // pred_region
      _
    $region65: #{tpu_custom_call.1} parent=1 // pred_fallthru
      _
    // Predicated region
    $region66: #{tpu_custom_call.1} parent=1 // pred_check
      _
    $region67: #{tpu_custom_call.1} parent=1 // pred_check_branch
      %106 = sbr.rel (0) target = $region69
    $region68: #{tpu_custom_call.1} parent=1 // pred_region
      _
    $region69: #{tpu_custom_call.1} parent=1 // pred_fallthru
      _
    // Predicated region
    $region70: #{tpu_custom_call.1} parent=1 // pred_check
      _
    $region71: #{tpu_custom_call.1} parent=1 // pred_check_branch
      %108 = sbr.rel (0) target = $region73
    $region72: #{tpu_custom_call.1} parent=1 // pred_region
      _
    $region73: #{tpu_custom_call.1} parent=1 // pred_fallthru
      _
    // Predicated region
    $region74: #{tpu_custom_call.1} parent=1 // pred_check
      _
    $region75: #{tpu_custom_call.1} parent=1 // pred_check_branch
      %110 = sbr.rel (0) target = $region77
    $region76: #{tpu_custom_call.1} parent=1 // pred_region
      _
    $region77: #{tpu_custom_call.1} parent=1 // pred_fallthru
      _
    // Predicated region
    $region78: #{tpu_custom_call.1} parent=1 // pred_check
      _
    $region79: #{tpu_custom_call.1} parent=1 // pred_check_branch
      %112 = sbr.rel (0) target = $region81
    $region80: #{tpu_custom_call.1} parent=1 // pred_region
      _
    $region81: #{tpu_custom_call.1} parent=1 // pred_fallthru
      _
    // Predicated region
    $region82: #{tpu_custom_call.1} parent=1 // pred_check
      _
    $region83: #{tpu_custom_call.1} parent=1 // pred_check_branch
      %114 = sbr.rel (0) target = $region85
    $region84: #{tpu_custom_call.1} parent=1 // pred_region
      _
    $region85: #{tpu_custom_call.1} parent=1 // pred_fallthru
      _
    // Predicated region
    $region86: #{tpu_custom_call.1} parent=1 // pred_check
      _
    $region87: #{tpu_custom_call.1} parent=1 // pred_check_branch
      %116 = sbr.rel (0) target = $region89
    $region88: #{tpu_custom_call.1} parent=1 // pred_region
      _
    $region89: #{tpu_custom_call.1} parent=1 // pred_fallthru
      _
    // Predicated region
    $region90: #{tpu_custom_call.1} parent=1 // pred_check
      _
    $region91: #{tpu_custom_call.1} parent=1 // pred_check_branch
      %118 = sbr.rel (0) target = $region93
    $region92: #{tpu_custom_call.1} parent=1 // pred_region
      _
    $region93: #{tpu_custom_call.1} parent=1 // pred_fallthru
      _
    // Predicated region
    $region94: #{tpu_custom_call.1} parent=1 // pred_check
      _
    $region95: #{tpu_custom_call.1} parent=1 // pred_check_branch
      %120 = sbr.rel (0) target = $region97
    $region96: #{tpu_custom_call.1} parent=1 // pred_region
      _
    $region97: #{tpu_custom_call.1} parent=1 // pred_fallthru
      _
    // Predicated region
    $region98: #{tpu_custom_call.1} parent=1 // pred_check
      _
    $region99: #{tpu_custom_call.1} parent=1 // pred_check_branch
      %122 = sbr.rel (0) target = $region101
    $region100: #{tpu_custom_call.1} parent=1 // pred_region
      _
    $region101: #{tpu_custom_call.1} parent=1 // pred_fallthru
      _
    // Predicated region
    $region102: #{tpu_custom_call.1} parent=1 // pred_check
      _
    $region103: #{tpu_custom_call.1} parent=1 // pred_check_branch
      %124 = sbr.rel (0) target = $region105
    $region104: #{tpu_custom_call.1} parent=1 // pred_region
      _
    $region105: #{tpu_custom_call.1} parent=1 // pred_fallthru
      _
    // Predicated region
    $region106: #{tpu_custom_call.1} parent=1 // pred_check
      _
    $region107: #{tpu_custom_call.1} parent=1 // pred_check_branch
      %126 = sbr.rel (0) target = $region109
    $region108: #{tpu_custom_call.1} parent=1 // pred_region
      _
    $region109: #{tpu_custom_call.1} parent=1 // pred_fallthru
      _
    // Predicated region
    $region110: #{tpu_custom_call.1} parent=1 // pred_check
      _
    $region111: #{tpu_custom_call.1} parent=1 // pred_check_branch
      %128 = sbr.rel (0) target = $region113
    $region112: #{tpu_custom_call.1} parent=1 // pred_region
      _
    $region113: #{tpu_custom_call.1} parent=1 // pred_fallthru
      _
    // Predicated region
    $region114: #{tpu_custom_call.1} parent=1 // pred_check
      _
    $region115: #{tpu_custom_call.1} parent=1 // pred_check_branch
      %130 = sbr.rel (0) target = $region117
    $region116: #{tpu_custom_call.1} parent=1 // pred_region
      _
    $region117: #{tpu_custom_call.1} parent=1 // pred_fallthru
      _
    // Predicated region
    $region118: #{tpu_custom_call.1} parent=1 // pred_check
      _
    $region119: #{tpu_custom_call.1} parent=1 // pred_check_branch
      %132 = sbr.rel (0) target = $region121
    $region120: #{tpu_custom_call.1} parent=1 // pred_region
      _
    $region121: #{tpu_custom_call.1} parent=1 // pred_fallthru
      _
    // Predicated region
    $region122: #{tpu_custom_call.1} parent=1 // pred_check
      _
    $region123: #{tpu_custom_call.1} parent=1 // pred_check_branch
      %134 = sbr.rel (0) target = $region125
    $region124: #{tpu_custom_call.1} parent=1 // pred_region
      _
    $region125: #{tpu_custom_call.1} parent=1 // pred_fallthru
      _
    // Predicated region
    $region126: #{tpu_custom_call.1} parent=1 // pred_check
      _
    $region127: #{tpu_custom_call.1} parent=1 // pred_check_branch
      %136 = sbr.rel (0) target = $region129
    $region128: #{tpu_custom_call.1} parent=1 // pred_region
      _
    $region129: #{tpu_custom_call.1} parent=1 // pred_fallthru
      _
    // Predicated region
    $region130: #{tpu_custom_call.1} parent=1 // pred_check
      _
    $region131: #{tpu_custom_call.1} parent=1 // pred_check_branch
      %138 = sbr.rel (0) target = $region133
    $region132: #{tpu_custom_call.1} parent=1 // pred_region
      _
    $region133: #{tpu_custom_call.1} parent=1 // pred_fallthru
      _
    %v139 = vld [vmem:[%s1] sm:$0x7]
    %v140 = vld [vmem:[%s1 + $0x4] sm:$0x7]
    %141 = vxpose.xlu0.b32.start [1/16] %v139, 128
    %142 = vxpose.xlu0.b32.cont [2/16] 0.0, 128
    %143 = vxpose.xlu0.b32.cont [3/16] 0.0, 128
    %144 = vxpose.xlu0.b32.cont [4/16] 0.0, 128
    %145 = vxpose.xlu0.b32.cont [5/16] 0.0, 128
    %146 = vxpose.xlu0.b32.cont [6/16] 0.0, 128
    %147 = vxpose.xlu0.b32.cont [7/16] 0.0, 128
    %148 = vxpose.xlu0.b32.cont [8/16] 0.0, 128
    %149 = vxpose.xlu0.b32.cont [9/16] 0.0, 128
    %150 = vxpose.xlu0.b32.cont [10/16] 0.0, 128
    %151 = vxpose.xlu0.b32.cont [11/16] 0.0, 128
    %152 = vxpose.xlu0.b32.cont [12/16] 0.0, 128
    %153 = vxpose.xlu0.b32.cont [13/16] 0.0, 128
    %154 = vxpose.xlu0.b32.cont [14/16] 0.0, 128
    %155 = vxpose.xlu0.b32.cont [15/16] 0.0, 128
    %156 = vxpose.xlu0.b32.end [16/16] 0.0, 128
    %v157 = vpop.trf.xlu0
    %v158 = vpop.trf.xlu0
    %v159 = vpop.trf.xlu0
    %v160 = vpop.trf.xlu0
    %v161 = vpop.trf.xlu0
    %v162 = vpop.trf.xlu0
    %v163 = vpop.trf.xlu0
    %v164 = vpop.trf.xlu0
    %v165 = vpop.trf.xlu0
    %v166 = vpop.trf.xlu0
    %v167 = vpop.trf.xlu0
    %v168 = vpop.trf.xlu0
    %v169 = vpop.trf.xlu0
    %v170 = vpop.trf.xlu0
    %v171 = vpop.trf.xlu0
    %v172 = vpop.trf.xlu0
    %173 = vxpose.xlu0.b32.start [1/16] %v140, 128
    %174 = vxpose.xlu0.b32.cont [2/16] 0.0, 128
    %175 = vxpose.xlu0.b32.cont [3/16] 0.0, 128
    %176 = vxpose.xlu0.b32.cont [4/16] 0.0, 128
    %177 = vxpose.xlu0.b32.cont [5/16] 0.0, 128
    %178 = vxpose.xlu0.b32.cont [6/16] 0.0, 128
    %179 = vxpose.xlu0.b32.cont [7/16] 0.0, 128
    %180 = vxpose.xlu0.b32.cont [8/16] 0.0, 128
    %181 = vxpose.xlu0.b32.cont [9/16] 0.0, 128
    %182 = vxpose.xlu0.b32.cont [10/16] 0.0, 128
    %183 = vxpose.xlu0.b32.cont [11/16] 0.0, 128
    %184 = vxpose.xlu0.b32.cont [12/16] 0.0, 128
    %185 = vxpose.xlu0.b32.cont [13/16] 0.0, 128
    %186 = vxpose.xlu0.b32.cont [14/16] 0.0, 128
    %187 = vxpose.xlu0.b32.cont [15/16] 0.0, 128
    %188 = vxpose.xlu0.b32.end [16/16] 0.0, 128
    %v189 = vpop.trf.xlu0
    %v190 = vpop.trf.xlu0
    %v191 = vpop.trf.xlu0
    %v192 = vpop.trf.xlu0
    %v193 = vpop.trf.xlu0
    %v194 = vpop.trf.xlu0
    %v195 = vpop.trf.xlu0
    %v196 = vpop.trf.xlu0
    %v197 = vpop.trf.xlu0
    %v198 = vpop.trf.xlu0
    %v199 = vpop.trf.xlu0
    %v200 = vpop.trf.xlu0
    %v201 = vpop.trf.xlu0
    %v202 = vpop.trf.xlu0
    %v203 = vpop.trf.xlu0
    %v204 = vpop.trf.xlu0
    %v205 = vld [vmem:[%s3] sm:$0xff]
    %v206 = vld [vmem:[%s3 + $0x8] sm:$0xff]
    %v207 = vld [vmem:[%s5] sm:$0x1]
    %v208 = vld [vmem:[%s7] sm:$0x1]
    %v209 = vld [vmem:[%s9] sm:$0x1]
    %v210 = vld [vmem:[%s11] sm:$0x1]
    %v211 = vld [vmem:[%s13] sm:$0x1]
    %vm212 = vcmask 23552
    %v214 = vsel %vm212, %v157, 0
    %v217 = vsel %vm212, %v158, 0
    %v220 = vsel %vm212, %v189, 0
    %v223 = vsel %vm212, %v190, 0
    %v226 = vsel %vm212, %v205, 0
    %v229 = vsel %vm212, %v206, 0
    %231 = vmatprep.subr.mxu0 0.0
    %232 = vmatpush1.xpose.msra.mxu0 0.0
    %233 = vmatprep.subr.mxu0 0.0
    %234 = vmatpush1.xpose.msra.mxu0 0.0
    %235 = vmatprep.subr.mxu0 0.0
    %236 = vmatpush1.xpose.msra.mxu0 0.0
    %237 = vmatprep.subr.mxu0 0.0
    %238 = vmatpush1.xpose.msra.mxu0 0.0
    %239 = vmatprep.subr.mxu0 0.0
    %240 = vmatpush1.xpose.msra.mxu0 0.0
    %241 = vmatprep.subr.mxu0 0.0
    %242 = vmatpush1.xpose.msra.mxu0 0.0
    %243 = vmatprep.subr.mxu0 0.0
    %244 = vmatpush1.xpose.msra.mxu0 0.0
    %245 = vmatprep.subr.mxu0 0.0
    %246 = vmatpush1.xpose.msra.mxu0 0.0
    %247 = vmatprep.subr.mxu0 0.0
    %248 = vmatpush1.xpose.msra.mxu0 0.0
    %249 = vmatprep.subr.mxu0 0.0
    %250 = vmatpush1.xpose.msra.mxu0 0.0
    %251 = vmatprep.subr.mxu0 0.0
    %252 = vmatpush1.xpose.msra.mxu0 0.0
    %253 = vmatprep.subr.mxu0 0.0
    %254 = vmatpush1.xpose.msra.mxu0 0.0
    %255 = vmatprep.subr.mxu0 0.0
    %256 = vmatpush1.xpose.msra.mxu0 0.0
    %257 = vmatprep.subr.mxu0 0.0
    %258 = vmatpush1.xpose.msra.mxu0 0.0
    %259 = vmatprep.subr.mxu0 0.0
    %260 = vmatpush1.xpose.msra.mxu0 %v229
    %261 = vmatprep.subr.mxu0 0.0
    %262 = vmatpush1.xpose.msra.mxu0 %v226
    %263 = vmatprep.subr.mxu0 0.0
    %264 = vmatpush2.xpose.msra.mxu0 0.0
    %265 = vmatprep.subr.mxu0 0.0
    %266 = vmatpush2.xpose.msra.mxu0 0.0
    %267 = vmatprep.subr.mxu0 0.0
    %268 = vmatpush2.xpose.msra.mxu0 0.0
    %269 = vmatprep.subr.mxu0 0.0
    %270 = vmatpush2.xpose.msra.mxu0 0.0
    %271 = vmatprep.subr.mxu0 0.0
    %272 = vmatpush2.xpose.msra.mxu0 0.0
    %273 = vmatprep.subr.mxu0 0.0
    %274 = vmatpush2.xpose.msra.mxu0 0.0
    %275 = vmatprep.subr.mxu0 0.0
    %276 = vmatpush2.xpose.msra.mxu0 0.0
    %277 = vmatprep.subr.mxu0 0.0
    %278 = vmatpush2.xpose.msra.mxu0 0.0
    %279 = vmatprep.subr.mxu0 0.0
    %280 = vmatpush2.xpose.msra.mxu0 0.0
    %281 = vmatprep.subr.mxu0 0.0
    %282 = vmatpush2.xpose.msra.mxu0 0.0
    %283 = vmatprep.subr.mxu0 0.0
    %284 = vmatpush2.xpose.msra.mxu0 0.0
    %285 = vmatprep.subr.mxu0 0.0
    %286 = vmatpush2.xpose.msra.mxu0 0.0
    %287 = vmatprep.subr.mxu0 0.0
    %288 = vmatpush2.xpose.msra.mxu0 0.0
    %289 = vmatprep.subr.mxu0 0.0
    %290 = vmatpush2.xpose.msra.mxu0 0.0
    %291 = vmatprep.subr.mxu0 0.0
    %292 = vmatpush2.xpose.msra.mxu0 0.0
    %293 = vmatprep.subr.mxu0 0.0
    %294 = vmatpush2.xpose.msra.mxu0 0.0
    %295 = vmatprep.mubr.f32.mxu0 0.0
    %296 = vmatmul.mubr.f32.gmra.mxu0 %v214
    %v297 = vpop.f32.mrf.mxu0
    %v298 = vadd.f32 0.0, %v297
    %v299 = vpop.f32.mrf.mxu0
    %300 = vmatprep.mubr.f32.mxu0 0.0
    %301 = vmatmul.mubr.f32.gmra.mxu0 %v217
    %v302 = vpop.f32.mrf.mxu0
    %v303 = vadd.f32 0.0, %v302
    %v304 = vpop.f32.mrf.mxu0
    %305 = vmatprep.mubr.f32.mxu0 0.0
    %306 = vmatmul.mubr.f32.gmra.mxu0 %v220
    %v307 = vpop.f32.mrf.mxu0
    %v308 = vadd.f32 0.0, %v307
    %v309 = vpop.f32.mrf.mxu0
    %310 = vmatprep.mubr.f32.mxu0 0.0
    %311 = vmatmul.mubr.f32.gmra.mxu0 %v223
    %v312 = vpop.f32.mrf.mxu0
    %v313 = vadd.f32 0.0, %v312
    %v314 = vpop.f32.mrf.mxu0
    %315 = vdwg.mxu0
    %v316 = vadd.f32 %v211, 1e-05
    %v317 = vrsqrt.pop %v316
    %v318 = vmul.f32 %v208, %v317
    %v319 = vmul.f32 %v210, %v318
    %v320 = vsub.f32 %v209, %v319
    %v322 = vlaneseq
    %v323 = vshrl.u32 %v322, 7
    %v324 = vsub.s32 0, %v323
    %v325 = vrot.slane %v318, %v324
    %v327 = vmul.f32 %v298, %v325
    %v328 = vmul.f32 %v303, %v325
    %v329 = vmul.f32 %v308, %v325
    %v330 = vmul.f32 %v313, %v325
    %v331 = vmul.f32 %v207, %v318
    %v332 = vadd.f32 %v331, %v320
    %v334 = vlaneseq
    %v335 = vshrl.u32 %v334, 7
    %v336 = vsub.s32 0, %v335
    %v337 = vrot.slane %v332, %v336
    %v339 = vadd.f32 %v327, %v337
    %v340 = vadd.f32 %v328, %v337
    %v341 = vadd.f32 %v329, %v337
    %v342 = vadd.f32 %v330, %v337
    %v343 = vmax.f32 %v339, 0.0
    %v344 = vmax.f32 %v340, 0.0
    %v345 = vmax.f32 %v341, 0.0
    %v346 = vmax.f32 %v342, 0.0
    %v347 = vld [vmem:[%s15] sm:$0xff]
    %v348 = vld [vmem:[%s15 + $0x8] sm:$0xff]
    %v349 = vld [vmem:[%s15 + $0x10] sm:$0xff]
    %v350 = vld [vmem:[%s15 + $0x18] sm:$0xff]
    %v351 = vld [vmem:[%s17] sm:$0x1]
    %v352 = vld [vmem:[%s19] sm:$0x1]
    %v353 = vld [vmem:[%s21] sm:$0x1]
    %v354 = vld [vmem:[%s23] sm:$0x1]
    %v355 = vld [vmem:[%s25] sm:$0x1]
    %vm356 = vcmask 130048
    %v358 = vsel %vm356, %v343, 0
    %v361 = vsel %vm356, %v344, 0
    %v364 = vsel %vm356, %v345, 0
    %v367 = vsel %vm356, %v346, 0
    %v370 = vsel %vm356, %v347, 0
    %v373 = vsel %vm356, %v348, 0
    %v376 = vsel %vm356, %v349, 0
    %v379 = vsel %vm356, %v350, 0
    %381 = vmatprep.subr.mxu0 0.0
    %382 = vmatpush1.xpose.msra.mxu0 0.0
    %383 = vmatprep.subr.mxu0 0.0
    %384 = vmatpush1.xpose.msra.mxu0 0.0
    %385 = vmatprep.subr.mxu0 0.0
    %386 = vmatpush1.xpose.msra.mxu0 0.0
    %387 = vmatprep.subr.mxu0 0.0
    %388 = vmatpush1.xpose.msra.mxu0 0.0
    %389 = vmatprep.subr.mxu0 0.0
    %390 = vmatpush1.xpose.msra.mxu0 0.0
    %391 = vmatprep.subr.mxu0 0.0
    %392 = vmatpush1.xpose.msra.mxu0 0.0
    %393 = vmatprep.subr.mxu0 0.0
    %394 = vmatpush1.xpose.msra.mxu0 0.0
    %395 = vmatprep.subr.mxu0 0.0
    %396 = vmatpush1.xpose.msra.mxu0 0.0
    %397 = vmatprep.subr.mxu0 0.0
    %398 = vmatpush1.xpose.msra.mxu0 0.0
    %399 = vmatprep.subr.mxu0 0.0
    %400 = vmatpush1.xpose.msra.mxu0 0.0
    %401 = vmatprep.subr.mxu0 0.0
    %402 = vmatpush1.xpose.msra.mxu0 0.0
    %403 = vmatprep.subr.mxu0 0.0
    %404 = vmatpush1.xpose.msra.mxu0 0.0
    %405 = vmatprep.subr.mxu0 0.0
    %406 = vmatpush1.xpose.msra.mxu0 %v379
    %407 = vmatprep.subr.mxu0 0.0
    %408 = vmatpush1.xpose.msra.mxu0 %v376
    %409 = vmatprep.subr.mxu0 0.0
    %410 = vmatpush1.xpose.msra.mxu0 %v373
    %411 = vmatprep.subr.mxu0 0.0
    %412 = vmatpush1.xpose.msra.mxu0 %v370
    %413 = vmatprep.subr.mxu0 0.0
    %414 = vmatpush2.xpose.msra.mxu0 0.0
    %415 = vmatprep.subr.mxu0 0.0
    %416 = vmatpush2.xpose.msra.mxu0 0.0
    %417 = vmatprep.subr.mxu0 0.0
    %418 = vmatpush2.xpose.msra.mxu0 0.0
    %419 = vmatprep.subr.mxu0 0.0
    %420 = vmatpush2.xpose.msra.mxu0 0.0
    %421 = vmatprep.subr.mxu0 0.0
    %422 = vmatpush2.xpose.msra.mxu0 0.0
    %423 = vmatprep.subr.mxu0 0.0
    %424 = vmatpush2.xpose.msra.mxu0 0.0
    %425 = vmatprep.subr.mxu0 0.0
    %426 = vmatpush2.xpose.msra.mxu0 0.0
    %427 = vmatprep.subr.mxu0 0.0
    %428 = vmatpush2.xpose.msra.mxu0 0.0
    %429 = vmatprep.subr.mxu0 0.0
    %430 = vmatpush2.xpose.msra.mxu0 0.0
    %431 = vmatprep.subr.mxu0 0.0
    %432 = vmatpush2.xpose.msra.mxu0 0.0
    %433 = vmatprep.subr.mxu0 0.0
    %434 = vmatpush2.xpose.msra.mxu0 0.0
    %435 = vmatprep.subr.mxu0 0.0
    %436 = vmatpush2.xpose.msra.mxu0 0.0
    %437 = vmatprep.subr.mxu0 0.0
    %438 = vmatpush2.xpose.msra.mxu0 0.0
    %439 = vmatprep.subr.mxu0 0.0
    %440 = vmatpush2.xpose.msra.mxu0 0.0
    %441 = vmatprep.subr.mxu0 0.0
    %442 = vmatpush2.xpose.msra.mxu0 0.0
    %443 = vmatprep.subr.mxu0 0.0
    %444 = vmatpush2.xpose.msra.mxu0 0.0
    %445 = vmatprep.mubr.f32.mxu0 0.0
    %446 = vmatmul.mubr.f32.gmra.mxu0 %v358
    %v447 = vpop.f32.mrf.mxu0
    %v448 = vadd.f32 0.0, %v447
    %v449 = vpop.f32.mrf.mxu0
    %450 = vmatprep.mubr.f32.mxu0 0.0
    %451 = vmatmul.mubr.f32.gmra.mxu0 %v361
    %v452 = vpop.f32.mrf.mxu0
    %v453 = vadd.f32 0.0, %v452
    %v454 = vpop.f32.mrf.mxu0
    %455 = vmatprep.mubr.f32.mxu0 0.0
    %456 = vmatmul.mubr.f32.gmra.mxu0 %v364
    %v457 = vpop.f32.mrf.mxu0
    %v458 = vadd.f32 0.0, %v457
    %v459 = vpop.f32.mrf.mxu0
    %460 = vmatprep.mubr.f32.mxu0 0.0
    %461 = vmatmul.mubr.f32.gmra.mxu0 %v367
    %v462 = vpop.f32.mrf.mxu0
    %v463 = vadd.f32 0.0, %v462
    %v464 = vpop.f32.mrf.mxu0
    %465 = vdwg.mxu0
    %v466 = vadd.f32 %v355, 1e-05
    %v467 = vrsqrt.pop %v466
    %v468 = vmul.f32 %v352, %v467
    %v469 = vmul.f32 %v354, %v468
    %v470 = vsub.f32 %v353, %v469
    %v472 = vlaneseq
    %v473 = vshrl.u32 %v472, 7
    %v474 = vsub.s32 0, %v473
    %v475 = vrot.slane %v468, %v474
    %v477 = vmul.f32 %v448, %v475
    %v478 = vmul.f32 %v453, %v475
    %v479 = vmul.f32 %v458, %v475
    %v480 = vmul.f32 %v463, %v475
    %v481 = vmul.f32 %v351, %v468
    %v482 = vadd.f32 %v481, %v470
    %v484 = vlaneseq
    %v485 = vshrl.u32 %v484, 7
    %v486 = vsub.s32 0, %v485
    %v487 = vrot.slane %v482, %v486
    %v489 = vadd.f32 %v477, %v487
    %v490 = vadd.f32 %v478, %v487
    %v491 = vadd.f32 %v479, %v487
    %v492 = vadd.f32 %v480, %v487
    %v493 = vmax.f32 %v489, 0.0
    %v494 = vmax.f32 %v490, 0.0
    %v495 = vmax.f32 %v491, 0.0
    %v496 = vmax.f32 %v492, 0.0
    %v497 = vld [vmem:[%s27] sm:$0xff]
    %v498 = vld [vmem:[%s27 + $0x8] sm:$0xff]
    %v499 = vld [vmem:[%s27 + $0x10] sm:$0xff]
    %v500 = vld [vmem:[%s27 + $0x18] sm:$0xff]
    %v501 = vld [vmem:[%s27 + $0x20] sm:$0xff]
    %v502 = vld [vmem:[%s27 + $0x28] sm:$0xff]
    %v503 = vld [vmem:[%s27 + $0x30] sm:$0xff]
    %v504 = vld [vmem:[%s27 + $0x38] sm:$0xff]
    %v505 = vld [vmem:[%s29] sm:$0x1]
    %v506 = vld [vmem:[%s31] sm:$0x1]
    %v507 = vld [vmem:[%s33] sm:$0x1]
    %v508 = vld [vmem:[%s35] sm:$0x1]
    %v509 = vld [vmem:[%s37] sm:$0x1]
    %vm510 = vcmask 261120
    %v512 = vsel %vm510, %v493, 0
    %v515 = vsel %vm510, %v494, 0
    %v518 = vsel %vm510, %v495, 0
    %v521 = vsel %vm510, %v496, 0
    %v524 = vsel %vm510, %v497, 0
    %v527 = vsel %vm510, %v498, 0
    %v530 = vsel %vm510, %v499, 0
    %v533 = vsel %vm510, %v500, 0
    %v536 = vsel %vm510, %v501, 0
    %v539 = vsel %vm510, %v502, 0
    %v542 = vsel %vm510, %v503, 0
    %v545 = vsel %vm510, %v504, 0
    %547 = vmatprep.subr.mxu0 0.0
    %548 = vmatpush1.xpose.msra.mxu0 0.0
    %549 = vmatprep.subr.mxu0 0.0
    %550 = vmatpush1.xpose.msra.mxu0 0.0
    %551 = vmatprep.subr.mxu0 0.0
    %552 = vmatpush1.xpose.msra.mxu0 0.0
    %553 = vmatprep.subr.mxu0 0.0
    %554 = vmatpush1.xpose.msra.mxu0 0.0
    %555 = vmatprep.subr.mxu0 0.0
    %556 = vmatpush1.xpose.msra.mxu0 0.0
    %557 = vmatprep.subr.mxu0 0.0
    %558 = vmatpush1.xpose.msra.mxu0 0.0
    %559 = vmatprep.subr.mxu0 0.0
    %560 = vmatpush1.xpose.msra.mxu0 0.0
    %561 = vmatprep.subr.mxu0 0.0
    %562 = vmatpush1.xpose.msra.mxu0 0.0
    %563 = vmatprep.subr.mxu0 0.0
    %564 = vmatpush1.xpose.msra.mxu0 %v545
    %565 = vmatprep.subr.mxu0 0.0
    %566 = vmatpush1.xpose.msra.mxu0 %v542
    %567 = vmatprep.subr.mxu0 0.0
    %568 = vmatpush1.xpose.msra.mxu0 %v539
    %569 = vmatprep.subr.mxu0 0.0
    %570 = vmatpush1.xpose.msra.mxu0 %v536
    %571 = vmatprep.subr.mxu0 0.0
    %572 = vmatpush1.xpose.msra.mxu0 %v533
    %573 = vmatprep.subr.mxu0 0.0
    %574 = vmatpush1.xpose.msra.mxu0 %v530
    %575 = vmatprep.subr.mxu0 0.0
    %576 = vmatpush1.xpose.msra.mxu0 %v527
    %577 = vmatprep.subr.mxu0 0.0
    %578 = vmatpush1.xpose.msra.mxu0 %v524
    %579 = vmatprep.subr.mxu0 0.0
    %580 = vmatpush2.xpose.msra.mxu0 0.0
    %581 = vmatprep.subr.mxu0 0.0
    %582 = vmatpush2.xpose.msra.mxu0 0.0
    %583 = vmatprep.subr.mxu0 0.0
    %584 = vmatpush2.xpose.msra.mxu0 0.0
    %585 = vmatprep.subr.mxu0 0.0
    %586 = vmatpush2.xpose.msra.mxu0 0.0
    %587 = vmatprep.subr.mxu0 0.0
    %588 = vmatpush2.xpose.msra.mxu0 0.0
    %589 = vmatprep.subr.mxu0 0.0
    %590 = vmatpush2.xpose.msra.mxu0 0.0
    %591 = vmatprep.subr.mxu0 0.0
    %592 = vmatpush2.xpose.msra.mxu0 0.0
    %593 = vmatprep.subr.mxu0 0.0
    %594 = vmatpush2.xpose.msra.mxu0 0.0
    %595 = vmatprep.subr.mxu0 0.0
    %596 = vmatpush2.xpose.msra.mxu0 0.0
    %597 = vmatprep.subr.mxu0 0.0
    %598 = vmatpush2.xpose.msra.mxu0 0.0
    %599 = vmatprep.subr.mxu0 0.0
    %600 = vmatpush2.xpose.msra.mxu0 0.0
    %601 = vmatprep.subr.mxu0 0.0
    %602 = vmatpush2.xpose.msra.mxu0 0.0
    %603 = vmatprep.subr.mxu0 0.0
    %604 = vmatpush2.xpose.msra.mxu0 0.0
    %605 = vmatprep.subr.mxu0 0.0
    %606 = vmatpush2.xpose.msra.mxu0 0.0
    %607 = vmatprep.subr.mxu0 0.0
    %608 = vmatpush2.xpose.msra.mxu0 0.0
    %609 = vmatprep.subr.mxu0 0.0
    %610 = vmatpush2.xpose.msra.mxu0 0.0
    %611 = vmatprep.mubr.f32.mxu0 0.0
    %612 = vmatmul.mubr.f32.gmra.mxu0 %v512
    %v613 = vpop.f32.mrf.mxu0
    %v614 = vadd.f32 0.0, %v613
    %v615 = vpop.f32.mrf.mxu0
    %616 = vmatprep.mubr.f32.mxu0 0.0
    %617 = vmatmul.mubr.f32.gmra.mxu0 %v515
    %v618 = vpop.f32.mrf.mxu0
    %v619 = vadd.f32 0.0, %v618
    %v620 = vpop.f32.mrf.mxu0
    %621 = vmatprep.mubr.f32.mxu0 0.0
    %622 = vmatmul.mubr.f32.gmra.mxu0 %v518
    %v623 = vpop.f32.mrf.mxu0
    %v624 = vadd.f32 0.0, %v623
    %v625 = vpop.f32.mrf.mxu0
    %626 = vmatprep.mubr.f32.mxu0 0.0
    %627 = vmatmul.mubr.f32.gmra.mxu0 %v521
    %v628 = vpop.f32.mrf.mxu0
    %v629 = vadd.f32 0.0, %v628
    %v630 = vpop.f32.mrf.mxu0
    %631 = vdwg.mxu0
    %v632 = vadd.f32 %v509, 1e-05
    %v633 = vrsqrt.pop %v632
    %v634 = vmul.f32 %v506, %v633
    %v635 = vmul.f32 %v508, %v634
    %v636 = vsub.f32 %v507, %v635
    %v638 = vlaneseq
    %v639 = vshrl.u32 %v638, 7
    %v640 = vsub.s32 0, %v639
    %v641 = vrot.slane %v634, %v640
    %v643 = vmul.f32 %v614, %v641
    %v644 = vmul.f32 %v619, %v641
    %v645 = vmul.f32 %v624, %v641
    %v646 = vmul.f32 %v629, %v641
    %v647 = vmul.f32 %v505, %v634
    %v648 = vadd.f32 %v647, %v636
    %v650 = vlaneseq
    %v651 = vshrl.u32 %v650, 7
    %v652 = vsub.s32 0, %v651
    %v653 = vrot.slane %v648, %v652
    %v655 = vadd.f32 %v643, %v653
    %v656 = vadd.f32 %v644, %v653
    %v657 = vadd.f32 %v645, %v653
    %v658 = vadd.f32 %v646, %v653
    %v659 = vmax.f32 %v655, 0.0
    %v660 = vmax.f32 %v656, 0.0
    %v661 = vmax.f32 %v657, 0.0
    %v662 = vmax.f32 %v658, 0.0
    %vm663 = vcmask 523264
    %v664 = vsel %vm663, %v659, -inf
    %v665 = vsel %vm663, %v660, -inf
    %v666 = vmax.f32 %v664, %v665
    %v667 = vrot.slane %v666, 4
    %v668 = vmax.f32 %v666, %v667
    %v669 = vrot.slane %v668, 2
    %v670 = vmax.f32 %v668, %v669
    %v671 = vrot.slane %v670, 1
    %v672 = vmax.f32 %v670, %v671
    %v673 = vsel %vm663, %v661, -inf
    %v674 = vsel %vm663, %v662, -inf
    %v675 = vmax.f32 %v673, %v674
    %v676 = vrot.slane %v675, 4
    %v677 = vmax.f32 %v675, %v676
    %v678 = vrot.slane %v677, 2
    %v679 = vmax.f32 %v677, %v678
    %v680 = vrot.slane %v679, 1
    %v681 = vmax.f32 %v679, %v680
    %v682 = vld [vmem:[%s39] sm:$0xff]
    %v683 = vld [vmem:[%s39 + $0x8] sm:$0xff]
    %v684 = vld [vmem:[%s39 + $0x10] sm:$0xff]
    %v685 = vld [vmem:[%s39 + $0x18] sm:$0xff]
    %v686 = vld [vmem:[%s41] sm:$0x1]
    %v687 = vld [vmem:[%s43] sm:$0x1]
    %v688 = vld [vmem:[%s45] sm:$0x1]
    %v689 = vld [vmem:[%s47] sm:$0x1]
    %v690 = vld [vmem:[%s49] sm:$0x1]
    %vm693 = vcmask 1041409
    %v694 = vsel %vm693, %v681, %v672
    %v695 = vsel %vm663, %v694, 0
    %v698 = vsel %vm663, %v682, 0
    %v701 = vsel %vm663, %v683, 0
    %v704 = vsel %vm663, %v684, 0
    %v707 = vsel %vm663, %v685, 0
    %709 = vmatprep.subr.mxu0 0.0
    %710 = vmatpush1.xpose.msra.mxu0 0.0
    %711 = vmatprep.subr.mxu0 0.0
    %712 = vmatpush1.xpose.msra.mxu0 0.0
    %713 = vmatprep.subr.mxu0 0.0
    %714 = vmatpush1.xpose.msra.mxu0 0.0
    %715 = vmatprep.subr.mxu0 0.0
    %716 = vmatpush1.xpose.msra.mxu0 0.0
    %717 = vmatprep.subr.mxu0 0.0
    %718 = vmatpush1.xpose.msra.mxu0 0.0
    %719 = vmatprep.subr.mxu0 0.0
    %720 = vmatpush1.xpose.msra.mxu0 0.0
    %721 = vmatprep.subr.mxu0 0.0
    %722 = vmatpush1.xpose.msra.mxu0 0.0
    %723 = vmatprep.subr.mxu0 0.0
    %724 = vmatpush1.xpose.msra.mxu0 0.0
    %725 = vmatprep.subr.mxu0 0.0
    %726 = vmatpush1.xpose.msra.mxu0 0.0
    %727 = vmatprep.subr.mxu0 0.0
    %728 = vmatpush1.xpose.msra.mxu0 0.0
    %729 = vmatprep.subr.mxu0 0.0
    %730 = vmatpush1.xpose.msra.mxu0 0.0
    %731 = vmatprep.subr.mxu0 0.0
    %732 = vmatpush1.xpose.msra.mxu0 0.0
    %733 = vmatprep.subr.mxu0 0.0
    %734 = vmatpush1.xpose.msra.mxu0 %v707
    %735 = vmatprep.subr.mxu0 0.0
    %736 = vmatpush1.xpose.msra.mxu0 %v704
    %737 = vmatprep.subr.mxu0 0.0
    %738 = vmatpush1.xpose.msra.mxu0 %v701
    %739 = vmatprep.subr.mxu0 0.0
    %740 = vmatpush1.xpose.msra.mxu0 %v698
    %741 = vmatprep.subr.mxu0 0.0
    %742 = vmatpush2.xpose.msra.mxu0 0.0
    %743 = vmatprep.subr.mxu0 0.0
    %744 = vmatpush2.xpose.msra.mxu0 0.0
    %745 = vmatprep.subr.mxu0 0.0
    %746 = vmatpush2.xpose.msra.mxu0 0.0
    %747 = vmatprep.subr.mxu0 0.0
    %748 = vmatpush2.xpose.msra.mxu0 0.0
    %749 = vmatprep.subr.mxu0 0.0
    %750 = vmatpush2.xpose.msra.mxu0 0.0
    %751 = vmatprep.subr.mxu0 0.0
    %752 = vmatpush2.xpose.msra.mxu0 0.0
    %753 = vmatprep.subr.mxu0 0.0
    %754 = vmatpush2.xpose.msra.mxu0 0.0
    %755 = vmatprep.subr.mxu0 0.0
    %756 = vmatpush2.xpose.msra.mxu0 0.0
    %757 = vmatprep.subr.mxu0 0.0
    %758 = vmatpush2.xpose.msra.mxu0 0.0
    %759 = vmatprep.subr.mxu0 0.0
    %760 = vmatpush2.xpose.msra.mxu0 0.0
    %761 = vmatprep.subr.mxu0 0.0
    %762 = vmatpush2.xpose.msra.mxu0 0.0
    %763 = vmatprep.subr.mxu0 0.0
    %764 = vmatpush2.xpose.msra.mxu0 0.0
    %765 = vmatprep.subr.mxu0 0.0
    %766 = vmatpush2.xpose.msra.mxu0 0.0
    %767 = vmatprep.subr.mxu0 0.0
    %768 = vmatpush2.xpose.msra.mxu0 0.0
    %769 = vmatprep.subr.mxu0 0.0
    %770 = vmatpush2.xpose.msra.mxu0 0.0
    %771 = vmatprep.subr.mxu0 0.0
    %772 = vmatpush2.xpose.msra.mxu0 0.0
    %773 = vmatprep.mubr.f32.mxu0 0.0
    %774 = vmatmul.mubr.f32.gmra.mxu0 %v695
    %v775 = vpop.f32.mrf.mxu0
    %v776 = vadd.f32 0.0, %v775
    %v777 = vpop.f32.mrf.mxu0
    %778 = vdwg.mxu0
    %v779 = vadd.f32 %v690, 1e-05
    %v780 = vrsqrt.pop %v779
    %v781 = vmul.f32 %v687, %v780
    %v782 = vmul.f32 %v689, %v781
    %v783 = vsub.f32 %v688, %v782
    %v785 = vlaneseq
    %v786 = vshrl.u32 %v785, 7
    %v787 = vsub.s32 0, %v786
    %v788 = vrot.slane %v781, %v787
    %v790 = vmul.f32 %v776, %v788
    %v791 = vmul.f32 %v686, %v781
    %v792 = vadd.f32 %v791, %v783
    %v794 = vlaneseq
    %v795 = vshrl.u32 %v794, 7
    %v796 = vsub.s32 0, %v795
    %v797 = vrot.slane %v792, %v796
    %v799 = vadd.f32 %v790, %v797
    %v800 = vmax.f32 %v799, 0.0
    %v801 = vld [vmem:[%s51] sm:$0xff]
    %v802 = vld [vmem:[%s51 + $0x8] sm:$0xff]
    %v803 = vld [vmem:[%s53] sm:$0x1]
    %v804 = vld [vmem:[%s55] sm:$0x1]
    %v805 = vld [vmem:[%s57] sm:$0x1]
    %v806 = vld [vmem:[%s59] sm:$0x1]
    %v807 = vld [vmem:[%s61] sm:$0x1]
    %v809 = vsel %vm510, %v800, 0
    %v812 = vsel %vm510, %v801, 0
    %v815 = vsel %vm510, %v802, 0
    %817 = vmatprep.subr.mxu0 0.0
    %818 = vmatpush1.xpose.msra.mxu0 0.0
    %819 = vmatprep.subr.mxu0 0.0
    %820 = vmatpush1.xpose.msra.mxu0 0.0
    %821 = vmatprep.subr.mxu0 0.0
    %822 = vmatpush1.xpose.msra.mxu0 0.0
    %823 = vmatprep.subr.mxu0 0.0
    %824 = vmatpush1.xpose.msra.mxu0 0.0
    %825 = vmatprep.subr.mxu0 0.0
    %826 = vmatpush1.xpose.msra.mxu0 0.0
    %827 = vmatprep.subr.mxu0 0.0
    %828 = vmatpush1.xpose.msra.mxu0 0.0
    %829 = vmatprep.subr.mxu0 0.0
    %830 = vmatpush1.xpose.msra.mxu0 0.0
    %831 = vmatprep.subr.mxu0 0.0
    %832 = vmatpush1.xpose.msra.mxu0 0.0
    %833 = vmatprep.subr.mxu0 0.0
    %834 = vmatpush1.xpose.msra.mxu0 0.0
    %835 = vmatprep.subr.mxu0 0.0
    %836 = vmatpush1.xpose.msra.mxu0 0.0
    %837 = vmatprep.subr.mxu0 0.0
    %838 = vmatpush1.xpose.msra.mxu0 0.0
    %839 = vmatprep.subr.mxu0 0.0
    %840 = vmatpush1.xpose.msra.mxu0 0.0
    %841 = vmatprep.subr.mxu0 0.0
    %842 = vmatpush1.xpose.msra.mxu0 0.0
    %843 = vmatprep.subr.mxu0 0.0
    %844 = vmatpush1.xpose.msra.mxu0 0.0
    %845 = vmatprep.subr.mxu0 0.0
    %846 = vmatpush1.xpose.msra.mxu0 %v815
    %847 = vmatprep.subr.mxu0 0.0
    %848 = vmatpush1.xpose.msra.mxu0 %v812
    %849 = vmatprep.subr.mxu0 0.0
    %850 = vmatpush2.xpose.msra.mxu0 0.0
    %851 = vmatprep.subr.mxu0 0.0
    %852 = vmatpush2.xpose.msra.mxu0 0.0
    %853 = vmatprep.subr.mxu0 0.0
    %854 = vmatpush2.xpose.msra.mxu0 0.0
    %855 = vmatprep.subr.mxu0 0.0
    %856 = vmatpush2.xpose.msra.mxu0 0.0
    %857 = vmatprep.subr.mxu0 0.0
    %858 = vmatpush2.xpose.msra.mxu0 0.0
    %859 = vmatprep.subr.mxu0 0.0
    %860 = vmatpush2.xpose.msra.mxu0 0.0
    %861 = vmatprep.subr.mxu0 0.0
    %862 = vmatpush2.xpose.msra.mxu0 0.0
    %863 = vmatprep.subr.mxu0 0.0
    %864 = vmatpush2.xpose.msra.mxu0 0.0
    %865 = vmatprep.subr.mxu0 0.0
    %866 = vmatpush2.xpose.msra.mxu0 0.0
    %867 = vmatprep.subr.mxu0 0.0
    %868 = vmatpush2.xpose.msra.mxu0 0.0
    %869 = vmatprep.subr.mxu0 0.0
    %870 = vmatpush2.xpose.msra.mxu0 0.0
    %871 = vmatprep.subr.mxu0 0.0
    %872 = vmatpush2.xpose.msra.mxu0 0.0
    %873 = vmatprep.subr.mxu0 0.0
    %874 = vmatpush2.xpose.msra.mxu0 0.0
    %875 = vmatprep.subr.mxu0 0.0
    %876 = vmatpush2.xpose.msra.mxu0 0.0
    %877 = vmatprep.subr.mxu0 0.0
    %878 = vmatpush2.xpose.msra.mxu0 0.0
    %879 = vmatprep.subr.mxu0 0.0
    %880 = vmatpush2.xpose.msra.mxu0 0.0
    %881 = vmatprep.mubr.f32.mxu0 0.0
    %882 = vmatmul.mubr.f32.gmra.mxu0 %v809
    %v883 = vpop.f32.mrf.mxu0
    %v884 = vadd.f32 0.0, %v883
    %v885 = vpop.f32.mrf.mxu0
    %886 = vdwg.mxu0
    %v887 = vadd.f32 %v807, 1e-05
    %v888 = vrsqrt.pop %v887
    %v889 = vmul.f32 %v804, %v888
    %v890 = vmul.f32 %v806, %v889
    %v891 = vsub.f32 %v805, %v890
    %v893 = vlaneseq
    %v894 = vshrl.u32 %v893, 7
    %v895 = vsub.s32 0, %v894
    %v896 = vrot.slane %v889, %v895
    %v898 = vmul.f32 %v884, %v896
    %v899 = vmul.f32 %v803, %v889
    %v900 = vadd.f32 %v899, %v891
    %v902 = vlaneseq
    %v903 = vshrl.u32 %v902, 7
    %v904 = vsub.s32 0, %v903
    %v905 = vrot.slane %v900, %v904
    %v907 = vadd.f32 %v898, %v905
    %v908 = vmax.f32 %v907, 0.0
    %v909 = vld [vmem:[%s63] sm:$0xff]
    %v910 = vld [vmem:[%s63 + $0x8] sm:$0xff]
    %v911 = vld [vmem:[%s65] sm:$0x1]
    %v913 = vlaneseq
    %v914 = vshrl.u32 %v913, 7
    %v915 = vsub.s32 0, %v914
    %v916 = vrot.slane %v911, %v915
    %v919 = vsel %vm356, %v908, 0
    %921 = vmatprep.subr.mxu0 0.0
    %922 = vmatpush1.msra.mxu0 0.0
    %923 = vmatprep.subr.mxu0 0.0
    %924 = vmatpush1.msra.mxu0 0.0
    %925 = vmatprep.subr.mxu0 0.0
    %926 = vmatpush1.msra.mxu0 0.0
    %927 = vmatprep.subr.mxu0 0.0
    %928 = vmatpush1.msra.mxu0 0.0
    %929 = vmatprep.subr.mxu0 0.0
    %930 = vmatpush1.msra.mxu0 0.0
    %931 = vmatprep.subr.mxu0 0.0
    %932 = vmatpush1.msra.mxu0 0.0
    %933 = vmatprep.subr.mxu0 0.0
    %934 = vmatpush1.msra.mxu0 0.0
    %935 = vmatprep.subr.mxu0 0.0
    %936 = vmatpush1.msra.mxu0 0.0
    %937 = vmatprep.subr.mxu0 0.0
    %938 = vmatpush1.msra.mxu0 0.0
    %939 = vmatprep.subr.mxu0 0.0
    %940 = vmatpush1.msra.mxu0 0.0
    %941 = vmatprep.subr.mxu0 0.0
    %942 = vmatpush1.msra.mxu0 0.0
    %943 = vmatprep.subr.mxu0 0.0
    %944 = vmatpush1.msra.mxu0 0.0
    %945 = vmatprep.subr.mxu0 0.0
    %946 = vmatpush1.msra.mxu0 0.0
    %947 = vmatprep.subr.mxu0 0.0
    %948 = vmatpush1.msra.mxu0 0.0
    %949 = vmatprep.subr.mxu0 0.0
    %950 = vmatpush1.msra.mxu0 %v910
    %951 = vmatprep.subr.mxu0 0.0
    %952 = vmatpush1.msra.mxu0 %v909
    %953 = vmatprep.subr.mxu0 0.0
    %954 = vmatpush2.msra.mxu0 0.0
    %955 = vmatprep.subr.mxu0 0.0
    %956 = vmatpush2.msra.mxu0 0.0
    %957 = vmatprep.subr.mxu0 0.0
    %958 = vmatpush2.msra.mxu0 0.0
    %959 = vmatprep.subr.mxu0 0.0
    %960 = vmatpush2.msra.mxu0 0.0
    %961 = vmatprep.subr.mxu0 0.0
    %962 = vmatpush2.msra.mxu0 0.0
    %963 = vmatprep.subr.mxu0 0.0
    %964 = vmatpush2.msra.mxu0 0.0
    %965 = vmatprep.subr.mxu0 0.0
    %966 = vmatpush2.msra.mxu0 0.0
    %967 = vmatprep.subr.mxu0 0.0
    %968 = vmatpush2.msra.mxu0 0.0
    %969 = vmatprep.subr.mxu0 0.0
    %970 = vmatpush2.msra.mxu0 0.0
    %971 = vmatprep.subr.mxu0 0.0
    %972 = vmatpush2.msra.mxu0 0.0
    %973 = vmatprep.subr.mxu0 0.0
    %974 = vmatpush2.msra.mxu0 0.0
    %975 = vmatprep.subr.mxu0 0.0
    %976 = vmatpush2.msra.mxu0 0.0
    %977 = vmatprep.subr.mxu0 0.0
    %978 = vmatpush2.msra.mxu0 0.0
    %979 = vmatprep.subr.mxu0 0.0
    %980 = vmatpush2.msra.mxu0 0.0
    %981 = vmatprep.subr.mxu0 0.0
    %982 = vmatpush2.msra.mxu0 0.0
    %983 = vmatprep.subr.mxu0 0.0
    %984 = vmatpush2.msra.mxu0 0.0
    %985 = vmatprep.mubr.f32.mxu0 0.0
    %986 = vmatmul.mubr.f32.gmra.mxu0 %v919
    %v987 = vpop.f32.mrf.mxu0
    %v988 = vadd.f32 %v916, %v987
    %v989 = vpop.f32.mrf.mxu0
    %990 = vdwg.mxu0
    %vm991 = vcmask 66560
    %992 = vst.msk [vmem:[#allocation2] sm:$0x3] %vm991, %v988
    // Predicated region
    $region134: #{tpu_custom_call.1} parent=1 // pred_check
      _
    $region135: #{tpu_custom_call.1} parent=1 // pred_check_branch
      %994 = sbr.rel (0) target = $region137
    $region136: #{tpu_custom_call.1} parent=1 // pred_region
      %s996 = ssub.s32 32, 32
      %997 = vsyncadd [#allocation3], %s996
      %s999 = sshll.u32 [#allocation2], 4
      %s1000 = int_to_ptr.vmem [resolvable:$true] %s999
      %1002 = dma.vmem_to_hbm [thread:$0]  %s1000, 32, %s67, [#allocation3]
    $region137: #{tpu_custom_call.1} parent=1 // pred_fallthru
      _
    // Predicated region
    $region138: #{tpu_custom_call.1} parent=1 // pred_check
      _
    $region139: #{tpu_custom_call.1} parent=1 // pred_check_branch
      %1004 = sbr.rel (0) target = $region141
    $region140: #{tpu_custom_call.1} parent=1 // pred_region
      %1005 = dma.done [#allocation3], 32
    $region141: #{tpu_custom_call.1} parent=1 // pred_fallthru
      _
    %1006 = vsyncpa [#allocation3], 1

</llo_original>
